<compile_context>
chip_gen: v7x
topology: tpu7x:2x2x1
jax: 0.10.0
libtpu: 0.0.40
codegen_flags: <defaults>
</compile_context>

<pallas_src>
import functools

import jax
import jax.numpy as jnp
from jax.experimental import pallas as pl
from jax.experimental.pallas import tpu as pltpu


def _round_up(x, m):
    return ((x + m - 1) // m) * m


def _temporal_attention_loss_kernel(pred_ref, tgt_ref, lens_ref, invden_ref,
                                    out_ref, num_acc, *,
                                    scale, base_loss, block_s, bf16_diff):
    si = pl.program_id(1)
    ns = pl.num_programs(1)
    TB, TS = pred_ref.shape

    @pl.when(si == 0)
    def _init():
        num_acc[...] = jnp.zeros_like(num_acc)

    lens = lens_ref[...]                                      # (TB, 1) int32

    # Absolute time index for this S tile, built once at (1, TS).
    s_local = jax.lax.broadcasted_iota(jnp.int32, (1, TS), 1)
    s_abs = s_local + si * block_s                            # (1, TS) int32

    # weights[s] = exp(alpha * s / seq_len), one EUP row per tile.
    w_row = jnp.exp(jnp.float32(scale) * s_abs.astype(jnp.float32))  # (1, TS)

    # valid[b, s] = s < sequence_lens[b].  Padded rows have lens == 0 and
    # time steps past the true S satisfy s_abs >= S >= lens, so this single
    # predicate also masks all ragged-edge (garbage) data.
    valid = s_abs < lens                                      # (TB, TS) bool

    if bf16_diff:
        # bf16 subtract then a single upcast (v6e/v7x bf16 VALU path).
        diff = (pred_ref[...] - tgt_ref[...]).astype(jnp.float32)
    else:
        diff = pred_ref[...].astype(jnp.float32) - tgt_ref[...].astype(jnp.float32)

    if base_loss == 'mse':
        losses = diff * diff
    elif base_loss == 'mae':
        losses = jnp.abs(diff)
    else:
        raise ValueError(f"unsupported base_loss: {base_loss}")

    # Select (not multiply-by-mask): garbage/NaN in OOB lanes cannot propagate.
    wl = jnp.where(valid, losses * w_row, 0.0)                # (TB, TS) f32

    # Lane-dense accumulation: add 128-wide lane chunks (static slices, no
    # relayout, no per-step cross-lane reduce).
    chunks = TS // 128
    part = wl[:, 0:128]
    for c in range(1, chunks):
        part = part + wl[:, c * 128:(c + 1) * 128]
    num_acc[...] += part                                      # (TB, 128)

    @pl.when(si == ns - 1)
    def _finalize():
        # Single cross-lane reduce; inv_den is the analytical 1/sum(weights)
        # per row (0 for padded / zero-length rows).
        partial = jnp.sum(num_acc[...] * invden_ref[...])     # scalar
        r = jax.lax.broadcasted_iota(jnp.int32, (8, 128), 0)
        c = jax.lax.broadcasted_iota(jnp.int32, (8, 128), 1)
        out_ref[...] = jnp.where((r == 0) & (c == 0), partial,
                                 jnp.float32(0.0)).reshape(1, 8, 128)


def temporal_attention_loss(predictions, targets, sequence_lens=None, *,
                            base_loss='mse', alpha=0.5,
                            block_b=256, block_s=4096):
    """Temporally weighted MSE/MAE loss (matches the PyTorch forward)."""
    B, S = predictions.shape
    itemsize = predictions.dtype.itemsize

    # Sublane packing of the native dtype (8 for f32, 16 for bf16, 32 for i8).
    packing = max(8, 32 // itemsize)

    # B tile: capped at ~ceil(B/2) so the "parallel" axis yields >=2 blocks
    # (megacore sharding on v7x); rounded to the dtype packing.
    b_aligned = _round_up(B, packing)
    half_b = _round_up(-(-B // 2), packing)
    TB = min(_round_up(block_b, packing), b_aligned, half_b)

    # S tile: lane-aligned; grows when TB shrank so per-step DMA stays large.
    target_elems = _round_up(block_b, packing) * _round_up(block_s, 128)
    ts_budget = max(_round_up(block_s, 128),
                    _round_up(-(-target_elems // TB), 128))
    TS = min(ts_budget, _round_up(S, 128))

    nb = pl.cdiv(B, TB)
    ns = pl.cdiv(S, TS)
    B_rows = nb * TB

    if sequence_lens is None:
        # TODO(synk): PyTorch's sequence_lens=None branch calls
        # weights.sum(dim=1) on a 1-D tensor (which errors); we implement the
        # intended semantics (all rows fully valid).
        lens = jnp.full((B,), S, dtype=jnp.int32)
    else:
        lens = jnp.clip(sequence_lens.astype(jnp.int32), 0, S)

    # Analytical per-row weight denominator (geometric series):
    #   den(L) = sum_{s<L} exp(alpha*s/S) = expm1(alpha*L/S) / expm1(alpha/S).
    lens_f = lens.astype(jnp.float32)
    if float(alpha) == 0.0:
        den = lens_f
    else:
        den = (jnp.expm1(jnp.float32(alpha) * lens_f / jnp.float32(S))
               / jnp.expm1(jnp.float32(alpha) / jnp.float32(S)))
    pos = lens > 0
    inv_den = jnp.where(pos, 1.0 / jnp.where(pos, den, 1.0), 0.0)

    # Only the tiny per-row arrays get padded (length 0 / inv_den 0 rows
    # contribute nothing); the big (B, S) arrays are streamed unpadded.
    lens2d = jnp.pad(lens, (0, B_rows - B)).reshape(B_rows, 1)
    invden2d = jnp.pad(inv_den.astype(jnp.float32),
                       (0, B_rows - B)).reshape(B_rows, 1)

    bf16_diff = (predictions.dtype == jnp.bfloat16
                 and targets.dtype == jnp.bfloat16)

    kernel = functools.partial(_temporal_attention_loss_kernel,
                               scale=float(alpha) / float(S),
                               base_loss=base_loss, block_s=TS,
                               bf16_diff=bf16_diff)

    tile_bytes = TB * TS * (predictions.dtype.itemsize + targets.dtype.itemsize)
    vmem_limit = int(min(64 * 1024 * 1024,
                         max(32 * 1024 * 1024, 2 * tile_bytes + (8 << 20))))

    bytes_in = B * S * (predictions.dtype.itemsize + targets.dtype.itemsize)
    partials = pl.pallas_call(
        kernel,
        out_shape=jax.ShapeDtypeStruct((nb, 8, 128), jnp.float32),
        grid_spec=pltpu.PrefetchScalarGridSpec(
            num_scalar_prefetch=0,
            grid=(nb, ns),
            in_specs=[
                pl.BlockSpec((TB, TS), lambda bi, si: (bi, si)),
                pl.BlockSpec((TB, TS), lambda bi, si: (bi, si)),
                pl.BlockSpec((TB, 1), lambda bi, si: (bi, 0)),
                pl.BlockSpec((TB, 1), lambda bi, si: (bi, 0)),
            ],
            out_specs=pl.BlockSpec((1, 8, 128), lambda bi, si: (bi, 0, 0)),
            scratch_shapes=[pltpu.VMEM((TB, 128), jnp.float32)],  # numerator acc
        ),
        compiler_params=pltpu.CompilerParams(
            dimension_semantics=("parallel", "arbitrary"),
            vmem_limit_bytes=vmem_limit,
        ),
        cost_estimate=pl.CostEstimate(
            flops=5 * B * S,
            transcendentals=nb * ns * TS,
            bytes_accessed=bytes_in + B_rows * 8 + nb * 8 * 128 * 4,
        ),
    )(predictions, targets, lens2d, invden2d)

    # Tiny reduction of per-B-tile partials; divide by the TRUE batch size.
    return jnp.sum(partials) / jnp.float32(B)


def _reference(predictions, targets, sequence_lens, alpha, base_loss):
    """Plain-JAX reference mirroring the PyTorch forward."""
    predictions = predictions.astype(jnp.float32)
    targets = targets.astype(jnp.float32)
    B, S = predictions.shape
    t = jnp.arange(S, dtype=jnp.float32)
    w = jnp.exp(alpha * t / S)                              # (S,)
    if sequence_lens is None:
        sequence_lens = jnp.full((B,), S, dtype=jnp.int32)
    mask = (jnp.arange(S)[None, :] < sequence_lens[:, None]).astype(jnp.float32)
    w = w[None, :] * mask                                   # (B, S)
    w = w / jnp.sum(w, axis=1, keepdims=True)
    diff = predictions - targets
    losses = diff * diff if base_loss == 'mse' else jnp.abs(diff)
    return jnp.sum(losses * w) / B


def _check(got, want, tol, name):
    got = float(got)
    want = float(want)
    assert abs(got - want) < tol * max(1.0, abs(want)), (name, got, want)


if __name__ == "__main__":
    key = jax.random.PRNGKey(0)

    # --- small case (single block, block bigger than array in both dims) ----
    B, S = 4, 16
    k1, k2, k3, k4 = jax.random.split(key, 4)
    preds = jax.random.normal(k1, (B, S), dtype=jnp.float32)
    tgts = jax.random.normal(k2, (B, S), dtype=jnp.float32)
    seq_lens = jnp.array([16, 12, 8, 5], dtype=jnp.int32)

    loss_mse = temporal_attention_loss(preds, tgts, seq_lens,
                                       base_loss='mse', alpha=0.5)
    jax.block_until_ready(loss_mse)
    _check(loss_mse, _reference(preds, tgts, seq_lens, 0.5, 'mse'), 1e-5, 'mse')

    loss_mae = temporal_attention_loss(preds, tgts, seq_lens,
                                       base_loss='mae', alpha=0.5)
    jax.block_until_ready(loss_mae)
    _check(loss_mae, _reference(preds, tgts, seq_lens, 0.5, 'mae'), 1e-5, 'mae')

    loss_none = temporal_attention_loss(preds, tgts, None,
                                        base_loss='mse', alpha=0.5)
    jax.block_until_ready(loss_none)
    _check(loss_none, _reference(preds, tgts, None, 0.5, 'mse'), 1e-5, 'none')

    # --- multi-tile case (ragged edges in BOTH grid dims, no wrapper pad) ----
    B2, S2 = 20, 300
    p2 = jax.random.normal(k3, (B2, S2), dtype=jnp.float32)
    t2 = jax.random.normal(k4, (B2, S2), dtype=jnp.float32)
    lens2 = (jax.random.randint(jax.random.PRNGKey(7), (B2,), 1, S2 + 1)
             .astype(jnp.int32))
    loss_tiled = temporal_attention_loss(p2, t2, lens2, base_loss='mse',
                                         alpha=0.5, block_b=8, block_s=128)
    jax.block_until_ready(loss_tiled)
    _check(loss_tiled, _reference(p2, t2, lens2, 0.5, 'mse'), 1e-5, 'tiled')

    # --- native-dtype (bf16) path: bf16 DMA, bf16 diff, f32 accumulate ------
    p_bf16 = preds.astype(jnp.bfloat16)
    t_bf16 = tgts.astype(jnp.bfloat16)
    loss_bf16 = temporal_attention_loss(p_bf16, t_bf16, seq_lens,
                                        base_loss='mse', alpha=0.5)
    jax.block_until_ready(loss_bf16)
    _check(loss_bf16, _reference(p_bf16, t_bf16, seq_lens, 0.5, 'mse'),
           2e-2, 'bf16')

    print("KERNEL_OK")
</pallas_src>

<mosaic_0001>
module attributes {stable_mosaic.version = 11 : i64} {
  func.func @_temporal_attention_loss_kernel(%arg0: i32, %arg1: i32, %arg2: memref<8x128xf32, #tpu.memory_space<vmem>>, %arg3: memref<8x128xf32, #tpu.memory_space<vmem>>, %arg4: memref<8x1xi32, #tpu.memory_space<vmem>>, %arg5: memref<8x1xf32, #tpu.memory_space<vmem>>, %arg6: memref<1x8x128xf32, #tpu.memory_space<vmem>>, %arg7: memref<8x128xf32, #tpu.memory_space<vmem>>) attributes {dimension_semantics = [#tpu.dimension_semantics<parallel>, #tpu.dimension_semantics<arbitrary>], iteration_bounds = array<i64: 1, 1>, scalar_prefetch = 0 : i64, scratch_operands = 1 : i64, tpu.core_type = #tpu.core_type<tc>, window_params = [{transform_indices = @transform_0, window_bounds = array<i64: 8, 128>}, {transform_indices = @transform_1, window_bounds = array<i64: 8, 128>}, {transform_indices = @transform_2, window_bounds = array<i64: 8, 1>}, {transform_indices = @transform_3, window_bounds = array<i64: 8, 1>}, {transform_indices = @transform_4, window_bounds = array<i64: 1, 8, 128>}]} {
    %c0_i32 = arith.constant 0 : i32
    %0 = arith.cmpi eq, %arg1, %c0_i32 : i32
    %1 = arith.extui %0 : i1 to i32
    %c0_i32_0 = arith.constant 0 : i32
    %2 = arith.cmpi ne, %1, %c0_i32_0 : i32
    scf.if %2 {
      %cst_13 = arith.constant 0.000000e+00 : f32
      %29 = vector.broadcast %cst_13 : f32 to vector<8x128xf32>
      %c0_14 = arith.constant 0 : index
      %c0_15 = arith.constant 0 : index
      %30 = vector.load %arg7[%c0_14, %c0_15] : memref<8x128xf32, #tpu.memory_space<vmem>>, vector<8x128xf32>
      tpu.vector_store %arg7[%c0_14, %c0_15], %29 {strides = array<i32>} : memref<8x128xf32, #tpu.memory_space<vmem>>, vector<8x128xf32>,
    } else {
    }
    %c0 = arith.constant 0 : index
    %c0_1 = arith.constant 0 : index
    %3 = vector.load %arg4[%c0, %c0_1] : memref<8x1xi32, #tpu.memory_space<vmem>>, vector<8x1xi32>
    %4 = tpu.iota {dimensions = array<i32: 1>} : vector<1x128xi32>
    %c128_i32 = arith.constant 128 : i32
    %5 = arith.muli %arg1, %c128_i32 : i32
    %6 = vector.broadcast %5 : i32 to vector<1x128xi32>
    %7 = arith.addi %4, %6 : vector<1x128xi32>
    %8 = arith.sitofp %7 : vector<1x128xi32> to vector<1x128xf32>
    %cst = arith.constant 3.125000e-02 : f32
    %9 = vector.broadcast %cst : f32 to vector<1x128xf32>
    %10 = arith.mulf %9, %8 : vector<1x128xf32>
    %11 = math.exp %10 : vector<1x128xf32>
    %12 = vector.broadcast %7 : vector<1x128xi32> to vector<8x128xi32>
    %13 = vector.broadcast %3 : vector<8x1xi32> to vector<8x128xi32>
    %14 = arith.cmpi slt, %12, %13 : vector<8x128xi32>
    %c0_2 = arith.constant 0 : index
    %c0_3 = arith.constant 0 : index
    %15 = vector.load %arg2[%c0_2, %c0_3] : memref<8x128xf32, #tpu.memory_space<vmem>>, vector<8x128xf32>
    %c0_4 = arith.constant 0 : index
    %c0_5 = arith.constant 0 : index
    %16 = vector.load %arg3[%c0_4, %c0_5] : memref<8x128xf32, #tpu.memory_space<vmem>>, vector<8x128xf32>
    %17 = arith.subf %15, %16 : vector<8x128xf32>
    %18 = arith.mulf %17, %17 : vector<8x128xf32>
    %19 = vector.broadcast %11 : vector<1x128xf32> to vector<8x128xf32>
    %20 = arith.mulf %18, %19 : vector<8x128xf32>
    %cst_6 = arith.constant 0.000000e+00 : f32
    %21 = vector.broadcast %cst_6 : f32 to vector<8x128xf32>
    %22 = arith.select %14, %20, %21 : vector<8x128xi1>, vector<8x128xf32>
    %c0_7 = arith.constant 0 : index
    %c0_8 = arith.constant 0 : index
    %23 = vector.load %arg7[%c0_7, %c0_8] : memref<8x128xf32, #tpu.memory_space<vmem>>, vector<8x128xf32>
    %24 = arith.addf %23, %22 : vector<8x128xf32>
    %c0_9 = arith.constant 0 : index
    %c0_10 = arith.constant 0 : index
    %25 = vector.load %arg7[%c0_9, %c0_10] : memref<8x128xf32, #tpu.memory_space<vmem>>, vector<8x128xf32>
    tpu.vector_store %arg7[%c0_9, %c0_10], %24 {strides = array<i32>} : memref<8x128xf32, #tpu.memory_space<vmem>>, vector<8x128xf32>,
    %c0_i32_11 = arith.constant 0 : i32
    %26 = arith.cmpi eq, %arg1, %c0_i32_11 : i32
    %27 = arith.extui %26 : i1 to i32
    %c0_i32_12 = arith.constant 0 : i32
    %28 = arith.cmpi ne, %27, %c0_i32_12 : i32
    scf.if %28 {
      %c0_13 = arith.constant 0 : index
      %c0_14 = arith.constant 0 : index
      %29 = vector.load %arg7[%c0_13, %c0_14] : memref<8x128xf32, #tpu.memory_space<vmem>>, vector<8x128xf32>
      %c0_15 = arith.constant 0 : index
      %c0_16 = arith.constant 0 : index
      %30 = vector.load %arg5[%c0_15, %c0_16] : memref<8x1xf32, #tpu.memory_space<vmem>>, vector<8x1xf32>
      %31 = vector.broadcast %30 : vector<8x1xf32> to vector<8x128xf32>
      %32 = arith.mulf %29, %31 : vector<8x128xf32>
      %33 = vector.shape_cast %32 : vector<8x128xf32> to vector<1x8x128xf32>
      %cst_17 = arith.constant dense<0.000000e+00> : vector<1xf32>
      %34 = vector.multi_reduction <add>, %33, %cst_17 [1, 2] : vector<1x8x128xf32> to vector<1xf32>
      %35 = vector.shape_cast %34 : vector<1xf32> to vector<1x1x1xf32>
      %36 = vector.extract %35[0, 0, 0] : f32 from vector<1x1x1xf32>
      %37 = tpu.iota {dimensions = array<i32: 0>} : vector<8x128xi32>
      %38 = tpu.iota {dimensions = array<i32: 1>} : vector<8x128xi32>
      %c0_i32_18 = arith.constant 0 : i32
      %39 = vector.broadcast %c0_i32_18 : i32 to vector<8x128xi32>
      %40 = arith.cmpi eq, %37, %39 : vector<8x128xi32>
      %c0_i32_19 = arith.constant 0 : i32
      %41 = vector.broadcast %c0_i32_19 : i32 to vector<8x128xi32>
      %42 = arith.cmpi eq, %38, %41 : vector<8x128xi32>
      %43 = arith.andi %40, %42 : vector<8x128xi1>
      %cst_20 = arith.constant 0.000000e+00 : f32
      %44 = vector.broadcast %36 : f32 to vector<8x128xf32>
      %45 = vector.broadcast %cst_20 : f32 to vector<8x128xf32>
      %46 = arith.select %43, %44, %45 : vector<8x128xi1>, vector<8x128xf32>
      %47 = vector.shape_cast %46 : vector<8x128xf32> to vector<1x8x128xf32>
      %c0_21 = arith.constant 0 : index
      %c0_22 = arith.constant 0 : index
      %c0_23 = arith.constant 0 : index
      %48 = vector.load %arg6[%c0_21, %c0_22, %c0_23] : memref<1x8x128xf32, #tpu.memory_space<vmem>>, vector<1x8x128xf32>
      tpu.vector_store %arg6[%c0_21, %c0_22, %c0_23], %47 {strides = array<i32>} : memref<1x8x128xf32, #tpu.memory_space<vmem>>, vector<1x8x128xf32>,
    } else {
    }
    return
  }
  func.func @transform_0(%arg0: i32, %arg1: i32) -> (i32, i32) {
    %c0_i32 = arith.constant 0 : i32
    return %arg0, %arg1 : i32, i32
  }
  func.func @transform_1(%arg0: i32, %arg1: i32) -> (i32, i32) {
    %c0_i32 = arith.constant 0 : i32
    return %arg0, %arg1 : i32, i32
  }
  func.func @transform_2(%arg0: i32, %arg1: i32) -> (i32, i32) {
    %c0_i32 = arith.constant 0 : i32
    %c0_i32_0 = arith.constant 0 : i32
    return %arg0, %c0_i32 : i32, i32
  }
  func.func @transform_3(%arg0: i32, %arg1: i32) -> (i32, i32) {
    %c0_i32 = arith.constant 0 : i32
    %c0_i32_0 = arith.constant 0 : i32
    return %arg0, %c0_i32 : i32, i32
  }
  func.func @transform_4(%arg0: i32, %arg1: i32) -> (i32, i32, i32) {
    %c0_i32 = arith.constant 0 : i32
    %c0_i32_0 = arith.constant 0 : i32
    %c0_i32_1 = arith.constant 0 : i32
    return %arg0, %c0_i32, %c0_i32_0 : i32, i32, i32
  }
}

</mosaic_0001>

<llo_original>
// kernel: tpu_custom_call.1
$region0: #{tpu_custom_call.1}
  #allocation0 [shape = 'u32[]', space=smem, size = 0x4, offset = 0x4, fixed_abs, tag = 'smem constant byte address 0x4 - core index']
  #allocation1 [shape = 'u32[144,128]{1,0:T(1,128)}', space=vmem, size = 0x12000, scoped, tag = 'internal scratch']
  #allocation2 [shape = 'f32[8,128]{1,0:T(8,128)}', space=vmem, size = 0x1000, scoped, tag = 'scratch operand']
  %s0 = inlined_call_operand.vmem [shape: f32[4,16], index: 0, kind: input, shape index: {}]
  %s1 = inlined_call_operand.vmem [shape: f32[4,16], index: 1, kind: input, shape index: {}]
  %s2 = inlined_call_operand.vmem [shape: s32[8,1], index: 2, kind: input, shape index: {}]
  %s3 = inlined_call_operand.vmem [shape: f32[8,1], index: 3, kind: input, shape index: {}]
  %s4 = inlined_call_operand.hbm [shape: f32[1,8,128], index: 4, kind: output, shape index: {}]
  %s5 = sld [smem:[#allocation0]]
  $region34: #{tpu_custom_call.1} parent=0
    _
  %s7 = ssub.s32 1, %s5
  %s8 = scalar_select 0, %s7, %s5
  $region1: #{tpu_custom_call.1} parent=0
    #allocation3 [shape = 'u8[4096]{0}', space=vmem, size = 0x1000, scoped, tag = 'output window, operand 0, single buffered']
    #allocation4 [shape = 's32[1]{0}', space=sflag, size = 0x4, scoped, tag = 'scoped memory for tpu_custom_call.1']
    %9 = vsyncpa [#allocation4], 0
    // Predicated region
    $region2: #{tpu_custom_call.1} parent=1 // pred_check
      _
    $region3: #{tpu_custom_call.1} parent=1 // pred_check_branch
      %11 = sbr.rel (0) target = $region5
    $region4: #{tpu_custom_call.1} parent=1 // pred_region
      _
    $region5: #{tpu_custom_call.1} parent=1 // pred_fallthru
      _
    // Predicated region
    $region6: #{tpu_custom_call.1} parent=1 // pred_check
      _
    $region7: #{tpu_custom_call.1} parent=1 // pred_check_branch
      %13 = sbr.rel (0) target = $region9
    $region8: #{tpu_custom_call.1} parent=1 // pred_region
      _
    $region9: #{tpu_custom_call.1} parent=1 // pred_fallthru
      _
    // Predicated region
    $region10: #{tpu_custom_call.1} parent=1 // pred_check
      _
    $region11: #{tpu_custom_call.1} parent=1 // pred_check_branch
      %15 = sbr.rel (0) target = $region13
    $region12: #{tpu_custom_call.1} parent=1 // pred_region
      _
    $region13: #{tpu_custom_call.1} parent=1 // pred_fallthru
      _
    // Predicated region
    $region14: #{tpu_custom_call.1} parent=1 // pred_check
      _
    $region15: #{tpu_custom_call.1} parent=1 // pred_check_branch
      %17 = sbr.rel (0) target = $region17
    $region16: #{tpu_custom_call.1} parent=1 // pred_region
      _
    $region17: #{tpu_custom_call.1} parent=1 // pred_fallthru
      _
    %p18 = scmp.eq.s32.totalorder 0, 0
    // Predicated region
    $region18: #{tpu_custom_call.1} parent=1 // pred_check
      %p19 = pneg %p18
    $region19: #{tpu_custom_call.1} parent=1 // pred_check_branch
      %21 = sbr.rel (%p19) target = $region21
    $region20: #{tpu_custom_call.1} parent=1 // pred_region
      %22 = vst [vmem:[#allocation2] sm:$0xff] 0.0
    $region21: #{tpu_custom_call.1} parent=1 // pred_fallthru
      _
    %v23 = vld [vmem:[%s2] sm:$0xff]
    %v24 = vlaneseq
    %v25 = vand.u32 %v24, 127
    %s26 = smul.u32 0, 128
    %v27 = vstv %s26
    %v28 = vadd.s32 %v25, %v27
    %v29 = vcvt.s32.f32 %v28
    %v30 = vmul.f32 %v29, 0.03125
    %v31 = vmul.f32 %v30, 1.442695
    %v32 = vpow.pop %v31
    %33 = vset.pattern.permute.xlu0 0
    %34 = vperm.xlu0 %33, %v23
    %v35 = vpop.permute.xlu0 %34
    %vm36 = vcmp.lt.s32.totalorder %v28, %v35
    %v37 = vld [vmem:[%s0] sm:$0xff]
    %v38 = vld [vmem:[%s1] sm:$0xff]
    %v39 = vsub.f32 %v37, %v38
    %v40 = vmul.f32 %v39, %v39
    %v41 = vmul.f32 %v40, %v32
    %v42 = vsel %vm36, %v41, 0.0
    %v43 = vld [vmem:[#allocation2] sm:$0xff]
    %v44 = vadd.f32 %v43, %v42
    %45 = vst [vmem:[#allocation2] sm:$0xff] %v44
    // Predicated region
    $region22: #{tpu_custom_call.1} parent=1 // pred_check
      %p46 = pneg %p18
    $region23: #{tpu_custom_call.1} parent=1 // pred_check_branch
      %48 = sbr.rel (%p46) target = $region25
    $region24: #{tpu_custom_call.1} parent=1 // pred_region
      %v49 = vld [vmem:[#allocation2] sm:$0xff]
      %v50 = vld [vmem:[%s3] sm:$0xff]
      %52 = vset.pattern.permute.xlu0 0
      %53 = vperm.xlu0 %52, %v50
      %v54 = vpop.permute.xlu0 %53
      %v56 = vmul.f32 %v49, %v54
      %57 = vadd.xlane.f32.xlu0 %v56
      %v58 = vpop.xlane.xlu0 %57
      %v59 = vrot.slane %v58, 4
      %v60 = vadd.f32 %v58, %v59
      %v61 = vrot.slane %v60, 2
      %v62 = vadd.f32 %v60, %v61
      %v63 = vrot.slane %v62, 1
      %v64 = vadd.f32 %v62, %v63
      %s65 = vtos %v64
      %v66 = vlaneseq
      %v67 = vshrl.u32 %v66, 7
      %vm68 = vcmp.eq.s32.totalorder %v67, 0
      %vm69 = vcmp.eq.s32.totalorder %v25, 0
      %vm70 = vmand %vm68, %vm69
      %v71 = vstv %s65
      %v72 = vsel %vm70, %v71, 0.0
      %73 = vst [vmem:[#allocation3] sm:$0xff] %v72
    $region25: #{tpu_custom_call.1} parent=1 // pred_fallthru
      _
    // Predicated region
    $region26: #{tpu_custom_call.1} parent=1 // pred_check
      _
    $region27: #{tpu_custom_call.1} parent=1 // pred_check_branch
      %75 = sbr.rel (0) target = $region29
    $region28: #{tpu_custom_call.1} parent=1 // pred_region
      %s77 = ssub.s32 128, 128
      %78 = vsyncadd [#allocation4], %s77
      %s80 = sshll.u32 [#allocation3], 4
      %s81 = int_to_ptr.vmem [resolvable:$true] %s80
      %83 = dma.vmem_to_hbm [thread:$0]  %s81, 128, %s4, [#allocation4]
    $region29: #{tpu_custom_call.1} parent=1 // pred_fallthru
      _
    // Predicated region
    $region30: #{tpu_custom_call.1} parent=1 // pred_check
      _
    $region31: #{tpu_custom_call.1} parent=1 // pred_check_branch
      %85 = sbr.rel (0) target = $region33
    $region32: #{tpu_custom_call.1} parent=1 // pred_region
      %86 = dma.done [#allocation4], 128
    $region33: #{tpu_custom_call.1} parent=1 // pred_fallthru
      _
    %87 = vsyncpa [#allocation4], 1

</llo_original>
